<compile_context>
chip_gen: v6e
topology: v6e:2x2x1
jax: 0.10.0
libtpu: 0.0.40
codegen_flags: <defaults>
</compile_context>

<pallas_src>
import functools

import jax
import jax.numpy as jnp
import numpy as np
from jax.experimental import pallas as pl
from jax.experimental.pallas import tpu as pltpu


def _vmem_capacity_bytes(default=128 * 1024 * 1024):
    try:
        info = pltpu.get_tpu_info()
        return int(getattr(info, "vmem_capacity_bytes", default))
    except Exception:
        return default


def _window_mean(xf, *, kernel_size, pad, LC, C):
    """Moving mean over time of one already-loaded f32 chunk of shape (rows, L*C)."""
    if pad > 0:
        first = xf[:, :C]
        last = xf[:, LC - C:]
        # Replicate padding built as a register value (no VMEM scratch, no
        # misaligned full-block store).  Flattened layout: time pad == C lanes.
        xpad = jnp.concatenate([first] * pad + [xf] + [last] * pad, axis=1)
    else:
        xpad = xf

    # Binary-doubling window sum: `cur` holds sums of `span` consecutive time
    # steps; k decomposed into powers of two -> ~2*log2(k) adds per element
    # instead of k.  All taps are static lane slices of register values.
    cur = xpad
    acc = None
    span = 1
    offset = 0
    rem = kernel_size
    while True:
        if rem & 1:
            tap = cur[:, offset * C: offset * C + LC]
            acc = tap if acc is None else acc + tap
            offset += span
        rem >>= 1
        if rem == 0:
            break
        w = cur.shape[1]
        cur = cur[:, : w - span * C] + cur[:, span * C:]
        span *= 2

    return acc * jnp.float32(1.0 / kernel_size)


def _series_decomp_kernel(x_ref, res_ref, mean_ref, *, kernel_size, pad,
                          seq_len, n_ch, chunk_rows):
    """Moving-average decomposition on a flattened (rows, L*C) block.

    x_ref:    (bt, L*C)   input rows (several batch elements)
    res_ref:  (bt, L*C)   residual output (x - moving_mean)
    mean_ref: (bt, L*C)   moving_mean output
    """
    C = n_ch
    LC = seq_len * C
    bt = x_ref.shape[0]

    # Static row-chunking keeps live f32 vector values bounded even for big
    # (multi-MiB) HBM blocks; chunk boundaries are static, sublane-aligned.
    r0 = 0
    while r0 < bt:
        rc = min(chunk_rows, bt - r0)
        rows = pl.ds(r0, rc)

        x = x_ref[rows, :]                  # single load; reused for residual
        xf = x.astype(jnp.float32)

        mean = _window_mean(xf, kernel_size=kernel_size, pad=pad, LC=LC, C=C)

        mean_ref[rows, :] = mean.astype(mean_ref.dtype)
        res_ref[rows, :] = (xf - mean).astype(res_ref.dtype)
        r0 += rc


def _choose_tiling(B, LC, itemsize, *, target_block_bytes, chunk_bytes,
                   block_rows=None):
    """Rows per grid block (bt) and rows per in-kernel compute chunk (cr)."""
    if block_rows is not None:
        bt = min(block_rows, B)
        if bt != B and bt % 8 != 0:
            bt = B                          # respect (8,128)-or-full-dim tiling
    else:
        rows = max(1, target_block_bytes // max(1, LC * itemsize))
        if B >= 16:
            # Guarantee >= 2 grid steps: shards across v7x's two TensorCores
            # and lets the BlockSpec pipeline actually prefetch.
            rows = min(rows, B // 2)
        if rows >= B:
            bt = B
        else:
            bt = max(8, (rows // 8) * 8)
            if bt >= B:
                bt = B

    row_f32 = LC * 4
    cr = max(8, (chunk_bytes // max(1, row_f32)) // 8 * 8)
    cr = min(cr, bt) if bt >= 8 else bt
    if cr <= 0:
        cr = bt
    return bt, cr


def series_decomp(x: jax.Array, kernel_size: int, *, block_rows=None):
    """Equivalent of PyTorch series_decomp.forward (odd kernel_size, stride=1)."""
    assert kernel_size % 2 == 1, "series_decomp requires an odd kernel_size"
    B, L, C = x.shape
    pad = (kernel_size - 1) // 2
    LC = L * C

    # Free row-major reshape: no data movement, just a lane-dense view.
    x_flat = x.reshape(B, LC)

    vmem_cap = _vmem_capacity_bytes()
    big_vmem = vmem_cap >= 100 * 1024 * 1024          # v5e/v6e: 128 MiB; v7x: 64 MiB
    target_block_bytes = (3 << 20) if big_vmem else (2 << 20)
    vmem_limit = (64 << 20) if big_vmem else (40 << 20)

    bt, cr = _choose_tiling(B, LC, x.dtype.itemsize,
                            target_block_bytes=target_block_bytes,
                            chunk_bytes=256 << 10,
                            block_rows=block_rows)
    grid = (pl.cdiv(B, bt),)

    kern = functools.partial(_series_decomp_kernel, kernel_size=kernel_size,
                             pad=pad, seq_len=L, n_ch=C, chunk_rows=cr)

    nbytes = B * LC * x.dtype.itemsize
    adds_per_elem = 2 * max(1, int(kernel_size).bit_length()) + 2
    cost = pl.CostEstimate(flops=adds_per_elem * B * LC,
                           transcendentals=0,
                           bytes_accessed=3 * nbytes)   # 1 read + 2 writes

    res_flat, mean_flat = pl.pallas_call(
        kern,
        out_shape=(jax.ShapeDtypeStruct((B, LC), x.dtype),
                   jax.ShapeDtypeStruct((B, LC), x.dtype)),
        grid_spec=pltpu.PrefetchScalarGridSpec(
            num_scalar_prefetch=0,
            grid=grid,
            in_specs=[pl.BlockSpec((bt, LC), lambda i: (i, 0))],
            out_specs=(pl.BlockSpec((bt, LC), lambda i: (i, 0)),
                       pl.BlockSpec((bt, LC), lambda i: (i, 0))),
        ),
        compiler_params=pltpu.CompilerParams(
            dimension_semantics=("parallel",),
            vmem_limit_bytes=vmem_limit,
        ),
        cost_estimate=cost,
    )(x_flat)

    return res_flat.reshape(B, L, C), mean_flat.reshape(B, L, C)


def _reference_series_decomp(x, kernel_size):
    """Pure-JAX reference matching the PyTorch semantics."""
    pad = (kernel_size - 1) // 2
    front = jnp.repeat(x[:, 0:1, :], pad, axis=1)
    end = jnp.repeat(x[:, -1:, :], pad, axis=1)
    xpad = jnp.concatenate([front, x, end], axis=1)
    L = x.shape[1]
    windows = jnp.stack([xpad[:, i:i + L, :] for i in range(kernel_size)], axis=0)
    mean = jnp.mean(windows, axis=0)
    return x - mean, mean


def _check(x, ks, **kw):
    res, mean = series_decomp(x, ks, **kw)
    jax.block_until_ready((res, mean))
    res_ref, mean_ref = _reference_series_decomp(x, ks)
    np.testing.assert_allclose(np.asarray(mean), np.asarray(mean_ref),
                               rtol=1e-5, atol=1e-5)
    np.testing.assert_allclose(np.asarray(res), np.asarray(res_ref),
                               rtol=1e-5, atol=1e-5)


if __name__ == "__main__":
    key = jax.random.PRNGKey(0)
    k1, k2, k3, k4 = jax.random.split(key, 4)

    # Primary check: small shapes matching the module's (B, L, C) convention.
    x1 = jax.random.normal(k1, (2, 16, 8), dtype=jnp.float32)
    _check(x1, 5)

    # Multi-block grid (2 parallel steps), non-power-of-two channel count.
    x2 = jax.random.normal(k2, (16, 24, 7), dtype=jnp.float32)
    _check(x2, 7, block_rows=8)

    # Partial final block (B not a multiple of the row tile): masked writeback.
    x3 = jax.random.normal(k3, (10, 32, 4), dtype=jnp.float32)
    _check(x3, 3, block_rows=8)

    # Large window (k=25): exercises several binary-doubling levels and the
    # automatic >=2-step grid split (B=32 -> two parallel blocks).
    x4 = jax.random.normal(k4, (32, 48, 16), dtype=jnp.float32)
    _check(x4, 25)

    print("KERNEL_OK")
</pallas_src>

<mosaic_0001>
module attributes {stable_mosaic.version = 11 : i64} {
  func.func @_series_decomp_kernel(%arg0: i32, %arg1: memref<2x128xf32, #tpu.memory_space<vmem>>, %arg2: memref<2x128xf32, #tpu.memory_space<vmem>>, %arg3: memref<2x128xf32, #tpu.memory_space<vmem>>) attributes {dimension_semantics = [#tpu.dimension_semantics<parallel>], iteration_bounds = array<i64: 1>, scalar_prefetch = 0 : i64, scratch_operands = 0 : i64, tpu.core_type = #tpu.core_type<tc>, window_params = [{transform_indices = @transform_0, window_bounds = array<i64: 2, 128>}, {transform_indices = @transform_1, window_bounds = array<i64: 2, 128>}, {transform_indices = @transform_2, window_bounds = array<i64: 2, 128>}]} {
    %c0 = arith.constant 0 : index
    %c0_0 = arith.constant 0 : index
    %0 = vector.load %arg1[%c0, %c0_0] : memref<2x128xf32, #tpu.memory_space<vmem>>, vector<2x128xf32>
    %1 = vector.extract_strided_slice %0 {offsets = [0, 0], sizes = [2, 8], strides = [1, 1]} : vector<2x128xf32> to vector<2x8xf32>
    %2 = vector.extract_strided_slice %0 {offsets = [0, 120], sizes = [2, 8], strides = [1, 1]} : vector<2x128xf32> to vector<2x8xf32>
    %3 = tpu.concatenate %1, %1, %0, %2, %2 in 1 : vector<2x8xf32>, vector<2x8xf32>, vector<2x128xf32>, vector<2x8xf32>, vector<2x8xf32> -> vector<2x160xf32>
    %4 = vector.extract_strided_slice %3 {offsets = [0, 0], sizes = [2, 128], strides = [1, 1]} : vector<2x160xf32> to vector<2x128xf32>
    %5 = vector.extract_strided_slice %3 {offsets = [0, 0], sizes = [2, 152], strides = [1, 1]} : vector<2x160xf32> to vector<2x152xf32>
    %6 = vector.extract_strided_slice %3 {offsets = [0, 8], sizes = [2, 152], strides = [1, 1]} : vector<2x160xf32> to vector<2x152xf32>
    %7 = arith.addf %5, %6 : vector<2x152xf32>
    %8 = vector.extract_strided_slice %7 {offsets = [0, 0], sizes = [2, 136], strides = [1, 1]} : vector<2x152xf32> to vector<2x136xf32>
    %9 = vector.extract_strided_slice %7 {offsets = [0, 16], sizes = [2, 136], strides = [1, 1]} : vector<2x152xf32> to vector<2x136xf32>
    %10 = arith.addf %8, %9 : vector<2x136xf32>
    %11 = vector.extract_strided_slice %10 {offsets = [0, 8], sizes = [2, 128], strides = [1, 1]} : vector<2x136xf32> to vector<2x128xf32>
    %12 = arith.addf %4, %11 : vector<2x128xf32>
    %cst = arith.constant 2.000000e-01 : f32
    %13 = vector.broadcast %cst : f32 to vector<2x128xf32>
    %14 = arith.mulf %12, %13 : vector<2x128xf32>
    %c0_1 = arith.constant 0 : index
    %c0_2 = arith.constant 0 : index
    %15 = vector.load %arg3[%c0_1, %c0_2] : memref<2x128xf32, #tpu.memory_space<vmem>>, vector<2x128xf32>
    tpu.vector_store %arg3[%c0_1, %c0_2], %14 {strides = array<i32>} : memref<2x128xf32, #tpu.memory_space<vmem>>, vector<2x128xf32>,
    %16 = arith.subf %0, %14 : vector<2x128xf32>
    %c0_3 = arith.constant 0 : index
    %c0_4 = arith.constant 0 : index
    %17 = vector.load %arg2[%c0_3, %c0_4] : memref<2x128xf32, #tpu.memory_space<vmem>>, vector<2x128xf32>
    tpu.vector_store %arg2[%c0_3, %c0_4], %16 {strides = array<i32>} : memref<2x128xf32, #tpu.memory_space<vmem>>, vector<2x128xf32>,
    return
  }
  func.func @transform_0(%arg0: i32) -> (i32, i32) {
    %c0_i32 = arith.constant 0 : i32
    %c0_i32_0 = arith.constant 0 : i32
    return %arg0, %c0_i32 : i32, i32
  }
  func.func @transform_1(%arg0: i32) -> (i32, i32) {
    %c0_i32 = arith.constant 0 : i32
    %c0_i32_0 = arith.constant 0 : i32
    return %arg0, %c0_i32 : i32, i32
  }
  func.func @transform_2(%arg0: i32) -> (i32, i32) {
    %c0_i32 = arith.constant 0 : i32
    %c0_i32_0 = arith.constant 0 : i32
    return %arg0, %c0_i32 : i32, i32
  }
}

</mosaic_0001>

<llo_original>
// kernel: tpu_custom_call.1
$region0: #{tpu_custom_call.1}
  #allocation0 [shape = 'u32[]', space=smem, size = 0x4, offset = 0x4, fixed_abs, tag = 'smem constant byte address 0x4 - core index']
  #allocation1 [shape = 'u32[144,128]{1,0:T(1,128)}', space=vmem, size = 0x12000, scoped, tag = 'internal scratch']
  %s0 = inlined_call_operand.hbm [shape: f32[2,128], index: 0, kind: input, shape index: {}]
  %s1 = inlined_call_operand.hbm [shape: f32[2,128], index: 1, kind: output, shape index: {0}]
  %s2 = inlined_call_operand.hbm [shape: f32[2,128], index: 2, kind: output, shape index: {1}]
  %3 = xla_tuple %s1, %s2
  %s4 = sld [smem:[#allocation0]]
  $region26: #{tpu_custom_call.1} parent=0
    _
  %s6 = ssub.s32 1, %s4
  %s7 = scalar_select 0, %s6, %s4
  $region1: #{tpu_custom_call.1} parent=0
    #allocation2 [shape = 'u8[1024]{0}', space=vmem, size = 0x400, scoped, tag = 'input window, operand 0, single buffered']
    #allocation3 [shape = 's32[1]{0}', space=sflag, size = 0x4, scoped, tag = 'scoped memory for tpu_custom_call.1']
    #allocation4 [shape = 's32[1]{0}', space=sflag, size = 0x4, scoped, tag = 'scoped memory for tpu_custom_call.1']
    #allocation5 [shape = 'u8[1024]{0}', space=vmem, size = 0x400, scoped, tag = 'output window, operand 0, single buffered']
    #allocation6 [shape = 'u8[1024]{0}', space=vmem, size = 0x400, scoped, tag = 'output window, operand 1, single buffered']
    #allocation7 [shape = 's32[1]{0}', space=sflag, size = 0x4, scoped, tag = 'scoped memory for tpu_custom_call.1']
    %8 = vsyncpa [#allocation3], 0
    %9 = vsyncpa [#allocation4], 0
    %10 = vsyncpa [#allocation7], 0
    // Predicated region
    $region2: #{tpu_custom_call.1} parent=1 // pred_check
      _
    $region3: #{tpu_custom_call.1} parent=1 // pred_check_branch
      %12 = sbr.rel (0) target = $region5
    $region4: #{tpu_custom_call.1} parent=1 // pred_region
      %s14 = ssub.s32 32, 32
      %15 = vsyncadd [#allocation3], %s14
      %s17 = sshll.u32 [#allocation2], 4
      %s18 = int_to_ptr.vmem [resolvable:$true] %s17
      %20 = dma.hbm_to_vmem [thread:$0]  %s0, 32, %s18, [#allocation3]
    $region5: #{tpu_custom_call.1} parent=1 // pred_fallthru
      _
    // Predicated region
    $region6: #{tpu_custom_call.1} parent=1 // pred_check
      _
    $region7: #{tpu_custom_call.1} parent=1 // pred_check_branch
      %22 = sbr.rel (0) target = $region9
    $region8: #{tpu_custom_call.1} parent=1 // pred_region
      %23 = dma.done [#allocation3], 32
    $region9: #{tpu_custom_call.1} parent=1 // pred_fallthru
      _
    %v24 = vld [vmem:[#allocation2] sm:$0x3]
    %26 = vrot.lane.b32.xlu0 %v24, 8
    %v27 = vpop.permute.xlu0 %26
    %29 = vrot.lane.b32.xlu0 %v24, 16
    %v30 = vpop.permute.xlu0 %29
    %32 = vrot.lane.b32.xlu0 %v24, 24
    %v33 = vpop.permute.xlu0 %32
    %35 = vrot.lane.b32.xlu0 %v24, 32
    %v36 = vpop.permute.xlu0 %35
    %vm38 = vcmask 64512
    %v39 = vsel %vm38, %v24, %v27
    %vm40 = vcmask 130048
    %v41 = vsel %vm40, %v39, %v30
    %v42 = vsel %vm40, %v30, %v33
    %vm43 = vcmask 195584
    %v44 = vsel %vm43, %v42, %v36
    %47 = vrot.lane.b32.xlu0 %v41, 120
    %v48 = vpop.permute.xlu0 %47
    %49 = vrot.lane.b32.xlu0 %v44, 120
    %v50 = vpop.permute.xlu0 %49
    %vm51 = vcmask 982016
    %v52 = vsel %vm51, %v48, %v50
    %v55 = vadd.f32 %v41, %v52
    %v56 = vadd.f32 %v44, %v50
    %59 = vrot.lane.b32.xlu0 %v55, 112
    %v60 = vpop.permute.xlu0 %59
    %61 = vrot.lane.b32.xlu0 %v56, 112
    %v62 = vpop.permute.xlu0 %61
    %vm63 = vcmask 916480
    %v64 = vsel %vm63, %v60, %v62
    %v67 = vadd.f32 %v55, %v64
    %v68 = vadd.f32 %v56, %v62
    %71 = vrot.lane.b32.xlu0 %v67, 120
    %v72 = vpop.permute.xlu0 %71
    %73 = vrot.lane.b32.xlu0 %v68, 120
    %v74 = vpop.permute.xlu0 %73
    %v75 = vsel %vm51, %v72, %v74
    %v77 = vadd.f32 %v41, %v75
    %v78 = vmul.f32 %v77, 0.2
    %79 = vst [vmem:[#allocation6] sm:$0x3] %v78
    %v80 = vsub.f32 %v24, %v78
    %81 = vst [vmem:[#allocation5] sm:$0x3] %v80
    // Predicated region
    $region10: #{tpu_custom_call.1} parent=1 // pred_check
      _
    $region11: #{tpu_custom_call.1} parent=1 // pred_check_branch
      %83 = sbr.rel (0) target = $region13
    $region12: #{tpu_custom_call.1} parent=1 // pred_region
      %s85 = ssub.s32 32, 32
      %86 = vsyncadd [#allocation4], %s85
      %s88 = sshll.u32 [#allocation5], 4
      %s89 = int_to_ptr.vmem [resolvable:$true] %s88
      %91 = dma.vmem_to_hbm [thread:$0]  %s89, 32, %s1, [#allocation4]
    $region13: #{tpu_custom_call.1} parent=1 // pred_fallthru
      _
    // Predicated region
    $region14: #{tpu_custom_call.1} parent=1 // pred_check
      _
    $region15: #{tpu_custom_call.1} parent=1 // pred_check_branch
      %93 = sbr.rel (0) target = $region17
    $region16: #{tpu_custom_call.1} parent=1 // pred_region
      %s95 = ssub.s32 32, 32
      %96 = vsyncadd [#allocation7], %s95
      %s98 = sshll.u32 [#allocation6], 4
      %s99 = int_to_ptr.vmem [resolvable:$true] %s98
      %101 = dma.vmem_to_hbm [thread:$0]  %s99, 32, %s2, [#allocation7]
    $region17: #{tpu_custom_call.1} parent=1 // pred_fallthru
      _
    // Predicated region
    $region18: #{tpu_custom_call.1} parent=1 // pred_check
      _
    $region19: #{tpu_custom_call.1} parent=1 // pred_check_branch
      %103 = sbr.rel (0) target = $region21
    $region20: #{tpu_custom_call.1} parent=1 // pred_region
      %104 = dma.done [#allocation4], 32
    $region21: #{tpu_custom_call.1} parent=1 // pred_fallthru
      _
    // Predicated region
    $region22: #{tpu_custom_call.1} parent=1 // pred_check
      _
    $region23: #{tpu_custom_call.1} parent=1 // pred_check_branch
      %106 = sbr.rel (0) target = $region25
    $region24: #{tpu_custom_call.1} parent=1 // pred_region
      %107 = dma.done [#allocation7], 32
    $region25: #{tpu_custom_call.1} parent=1 // pred_fallthru
      _
    %108 = vsyncpa [#allocation3], 1
    %109 = vsyncpa [#allocation4], 1
    %110 = vsyncpa [#allocation7], 1

</llo_original>
